<compile_context>
chip_gen: v6e
topology: v6e:2x2x1
jax: 0.10.0
libtpu: 0.0.40
codegen_flags: <defaults>
</compile_context>

<pallas_src>
import functools

import jax
import jax.numpy as jnp
from jax.experimental import pallas as pl
from jax.experimental.pallas import tpu as pltpu

LANE = 128
_X_TILE_BUDGET = 16 * 1024 * 1024   # bytes for double-buffered x tiles
_TB_MAX = 2048                      # biggest useful batch tile
_TB_TARGET = 512                    # below this, prefer splitting K instead


def _round_up(n, m):
    return ((n + m - 1) // m) * m


def _linear_kernel(x_ref, w_ref, b_ref, o_ref, acc_ref):
    # x_ref: (TB, TK)  w_ref: (TK, Cpad)  b_ref: (1, Cpad) f32
    # o_ref: (TB, Cpad)  acc_ref: (TB, Cpad) f32 scratch
    k = pl.program_id(1)

    @pl.when(k == 0)
    def _():
        acc_ref[...] = jnp.zeros_like(acc_ref)

    # Operand cast (if params were prepared in bf16) happens here, hidden under
    # the x DMA; MXU accumulation stays f32.
    acc_ref[...] += jnp.dot(
        x_ref[...].astype(w_ref.dtype), w_ref[...],
        preferred_element_type=jnp.float32,
    )

    @pl.when(k == pl.num_programs(1) - 1)
    def _():
        o_ref[...] = (acc_ref[...] + b_ref[...]).astype(o_ref.dtype)


def prepare_params(weight, bias, *, compute_dtype=jnp.float32):
    """One-time parameter prep (outside the hot path).

    weight: (C, F) as stored by torch nn.Linear; bias: (C,).
    Returns weight transposed + zero-padded to (F, Cpad) and bias padded to
    (1, Cpad) f32, with Cpad a multiple of 128 (lane-dense output tiles).
    NOTE: compute_dtype=bfloat16 changes numerics vs the f32 torch reference;
    use a looser tolerance (e.g. atol/rtol ~1e-2) in that mode.
    """
    C, F = weight.shape
    Cpad = _round_up(max(C, 1), LANE)
    w_fc = jnp.zeros((F, Cpad), compute_dtype).at[:, :C].set(
        weight.T.astype(compute_dtype))
    b_fc = jnp.zeros((1, Cpad), jnp.float32).at[0, :C].set(
        bias.astype(jnp.float32))
    return w_fc, b_fc


def _plan_tiles(B, F, x_itemsize, sublane):
    """Pick (TB, TK): TB from a VMEM budget; split K only for very large F."""

    def tb_budget(tk):
        tb = _X_TILE_BUDGET // (2 * tk * x_itemsize)
        return max(sublane, min(_TB_MAX, (tb // sublane) * sublane))

    # Keep the full (F, Cpad) weight resident unless that forces the batch tile
    # below _TB_TARGET; then stream 128-aligned K chunks that divide F exactly
    # (exact division keeps undefined pad data out of the accumulation).
    tk = F
    if F % LANE == 0 and tb_budget(F) < _TB_TARGET:
        for cand in (2048, 1024, 512, 256, 128):
            if cand < F and F % cand == 0:
                tk = cand
                break

    if B <= sublane:
        return B, tk                               # one full-extent batch block

    tb = tb_budget(tk)
    tb = min(tb, _round_up(B, sublane))            # don't overshoot the batch
    tb = min(tb, _round_up(-(-B // 2), sublane))   # >= 2 tiles -> v7x megacore
    return max(sublane, tb), tk


@functools.partial(jax.jit, static_argnames=("num_classes",))
def predictor_forward(x, w_fc, b_fc, num_classes):
    """x: (B, F); w_fc: (F, Cpad) pre-transposed/padded; b_fc: (1, Cpad) f32.

    Returns (B, num_classes) float32, same math as torch: x @ W.T + b.
    """
    B, F = x.shape
    Cpad = w_fc.shape[1]

    x_itemsize = jnp.dtype(x.dtype).itemsize
    w_itemsize = jnp.dtype(w_fc.dtype).itemsize
    sublane = 16 if x_itemsize == 2 else 8         # bf16 packs 16 sublanes/vreg

    TB, TK = _plan_tiles(B, F, x_itemsize, sublane)
    nb = -(-B // TB)
    nk = F // TK                                   # TK == F or TK divides F

    # Constant-index weight/bias never re-DMA: single-buffer them to save VMEM.
    weight_mode = pl.Buffered(1) if nk == 1 else None

    # Explicit VMEM budget: double-buffered x/out + weight + f32 accumulator.
    working = (
        2 * TB * TK * x_itemsize
        + (1 if nk == 1 else 2) * TK * Cpad * w_itemsize
        + 2 * TB * Cpad * 4
        + TB * Cpad * 4
        + 2 * Cpad * 4
    )
    vmem_limit = int(min(56 << 20, max(16 << 20, working + working // 4 + (2 << 20))))

    out = pl.pallas_call(
        _linear_kernel,
        out_shape=jax.ShapeDtypeStruct((B, Cpad), jnp.float32),
        grid=(nb, nk),
        in_specs=[
            pl.BlockSpec((TB, TK), lambda i, k: (i, k)),                 # streamed x
            pl.BlockSpec((TK, Cpad), lambda i, k: (k, 0),
                         pipeline_mode=weight_mode),                     # weight
            pl.BlockSpec((1, Cpad), lambda i, k: (0, 0),
                         pipeline_mode=pl.Buffered(1)),                  # bias
        ],
        out_specs=pl.BlockSpec((TB, Cpad), lambda i, k: (i, 0)),
        scratch_shapes=[pltpu.VMEM((TB, Cpad), jnp.float32)],
        compiler_params=pltpu.CompilerParams(
            dimension_semantics=("parallel", "arbitrary"),
            vmem_limit_bytes=vmem_limit,
        ),
        cost_estimate=pl.CostEstimate(
            flops=2 * B * F * Cpad,
            transcendentals=0,
            bytes_accessed=(x_itemsize * B * F + w_itemsize * F * Cpad
                            + 4 * B * Cpad),
        ),
    )(x, w_fc, b_fc)

    return out[:, :num_classes]


if __name__ == "__main__":
    # Small shapes consistent with the module: Linear(input_feature, num_classes).
    # batch=12 exercises both a multi-tile batch grid and a partial last block.
    batch, input_feature, num_classes = 12, 256, 10

    key = jax.random.PRNGKey(0)
    k_x, k_w, k_b = jax.random.split(key, 3)

    # Deterministic init mimicking nn.Linear default: U(-1/sqrt(in), 1/sqrt(in)).
    bound = 1.0 / jnp.sqrt(jnp.float32(input_feature))
    weight = jax.random.uniform(k_w, (num_classes, input_feature),
                                minval=-bound, maxval=bound, dtype=jnp.float32)
    bias = jax.random.uniform(k_b, (num_classes,),
                              minval=-bound, maxval=bound, dtype=jnp.float32)
    x = jax.random.normal(k_x, (batch, input_feature), dtype=jnp.float32)

    # One-time parameter prep (transpose/pad kept out of the per-call hot path).
    # For extra throughput on v6e/v7x pass compute_dtype=jnp.bfloat16 (f32 acc kept,
    # looser tolerance needed).
    w_fc, b_fc = prepare_params(weight, bias, compute_dtype=jnp.float32)

    out = predictor_forward(x, w_fc, b_fc, num_classes)
    out = jax.block_until_ready(out)

    # Reference check against plain JAX (same math as torch: x @ W.T + b).
    ref = x @ weight.T + bias
    assert out.shape == (batch, num_classes)
    assert jnp.allclose(out, ref, atol=1e-5, rtol=1e-5)

    print("KERNEL_OK")
</pallas_src>

<mosaic_0001>
module attributes {stable_mosaic.version = 11 : i64} {
  func.func @_linear_kernel(%arg0: i32, %arg1: i32, %arg2: memref<8x256xf32, #tpu.memory_space<vmem>>, %arg3: memref<256x128xf32, #tpu.memory_space<vmem>>, %arg4: memref<1x128xf32, #tpu.memory_space<vmem>>, %arg5: memref<8x128xf32, #tpu.memory_space<vmem>>, %arg6: memref<8x128xf32, #tpu.memory_space<vmem>>) attributes {dimension_semantics = [#tpu.dimension_semantics<parallel>, #tpu.dimension_semantics<arbitrary>], iteration_bounds = array<i64: 2, 1>, scalar_prefetch = 0 : i64, scratch_operands = 1 : i64, tpu.core_type = #tpu.core_type<tc>, window_params = [{transform_indices = @transform_0, window_bounds = array<i64: 8, 256>}, {pipeline_mode = #tpu.pipeline_mode<synchronous>, transform_indices = @transform_1, window_bounds = array<i64: 256, 128>}, {pipeline_mode = #tpu.pipeline_mode<synchronous>, transform_indices = @transform_2, window_bounds = array<i64: 1, 128>}, {transform_indices = @transform_3, window_bounds = array<i64: 8, 128>}]} {
    %c0_i32 = arith.constant 0 : i32
    %0 = arith.cmpi eq, %arg1, %c0_i32 : i32
    %1 = arith.extui %0 : i1 to i32
    %c0_i32_0 = arith.constant 0 : i32
    %2 = arith.cmpi ne, %1, %c0_i32_0 : i32
    scf.if %2 {
      %cst_10 = arith.constant 0.000000e+00 : f32
      %12 = vector.broadcast %cst_10 : f32 to vector<8x128xf32>
      %c0_11 = arith.constant 0 : index
      %c0_12 = arith.constant 0 : index
      %13 = vector.load %arg6[%c0_11, %c0_12] : memref<8x128xf32, #tpu.memory_space<vmem>>, vector<8x128xf32>
      tpu.vector_store %arg6[%c0_11, %c0_12], %12 {strides = array<i32>} : memref<8x128xf32, #tpu.memory_space<vmem>>, vector<8x128xf32>,
    } else {
    }
    %c0 = arith.constant 0 : index
    %c0_1 = arith.constant 0 : index
    %3 = vector.load %arg6[%c0, %c0_1] : memref<8x128xf32, #tpu.memory_space<vmem>>, vector<8x128xf32>
    %c0_2 = arith.constant 0 : index
    %c0_3 = arith.constant 0 : index
    %4 = vector.load %arg2[%c0_2, %c0_3] : memref<8x256xf32, #tpu.memory_space<vmem>>, vector<8x256xf32>
    %c0_4 = arith.constant 0 : index
    %c0_5 = arith.constant 0 : index
    %5 = vector.load %arg3[%c0_4, %c0_5] : memref<256x128xf32, #tpu.memory_space<vmem>>, vector<256x128xf32>
    %cst = arith.constant dense<0.000000e+00> : vector<8x128xf32>
    %6 = tpu.matmul %4, %5, %cst {dimension_numbers = #tpu.dot_dimension_numbers<[1], [0], [0], [1], [0, 0, 1, 1], [], []>} : vector<8x256xf32>, vector<256x128xf32>, vector<8x128xf32> -> vector<8x128xf32>
    %7 = arith.addf %3, %6 : vector<8x128xf32>
    %c0_6 = arith.constant 0 : index
    %c0_7 = arith.constant 0 : index
    %8 = vector.load %arg6[%c0_6, %c0_7] : memref<8x128xf32, #tpu.memory_space<vmem>>, vector<8x128xf32>
    tpu.vector_store %arg6[%c0_6, %c0_7], %7 {strides = array<i32>} : memref<8x128xf32, #tpu.memory_space<vmem>>, vector<8x128xf32>,
    %c0_i32_8 = arith.constant 0 : i32
    %9 = arith.cmpi eq, %arg1, %c0_i32_8 : i32
    %10 = arith.extui %9 : i1 to i32
    %c0_i32_9 = arith.constant 0 : i32
    %11 = arith.cmpi ne, %10, %c0_i32_9 : i32
    scf.if %11 {
      %c0_10 = arith.constant 0 : index
      %c0_11 = arith.constant 0 : index
      %12 = vector.load %arg6[%c0_10, %c0_11] : memref<8x128xf32, #tpu.memory_space<vmem>>, vector<8x128xf32>
      %c0_12 = arith.constant 0 : index
      %c0_13 = arith.constant 0 : index
      %13 = vector.load %arg4[%c0_12, %c0_13] : memref<1x128xf32, #tpu.memory_space<vmem>>, vector<1x128xf32>
      %14 = vector.broadcast %13 : vector<1x128xf32> to vector<8x128xf32>
      %15 = arith.addf %12, %14 : vector<8x128xf32>
      %c0_14 = arith.constant 0 : index
      %c0_15 = arith.constant 0 : index
      %16 = vector.load %arg5[%c0_14, %c0_15] : memref<8x128xf32, #tpu.memory_space<vmem>>, vector<8x128xf32>
      tpu.vector_store %arg5[%c0_14, %c0_15], %15 {strides = array<i32>} : memref<8x128xf32, #tpu.memory_space<vmem>>, vector<8x128xf32>,
    } else {
    }
    return
  }
  func.func @transform_0(%arg0: i32, %arg1: i32) -> (i32, i32) {
    %c0_i32 = arith.constant 0 : i32
    return %arg0, %arg1 : i32, i32
  }
  func.func @transform_1(%arg0: i32, %arg1: i32) -> (i32, i32) {
    %c0_i32 = arith.constant 0 : i32
    %c0_i32_0 = arith.constant 0 : i32
    return %arg1, %c0_i32 : i32, i32
  }
  func.func @transform_2(%arg0: i32, %arg1: i32) -> (i32, i32) {
    %c0_i32 = arith.constant 0 : i32
    %c0_i32_0 = arith.constant 0 : i32
    %c0_i32_1 = arith.constant 0 : i32
    return %c0_i32, %c0_i32_0 : i32, i32
  }
  func.func @transform_3(%arg0: i32, %arg1: i32) -> (i32, i32) {
    %c0_i32 = arith.constant 0 : i32
    %c0_i32_0 = arith.constant 0 : i32
    return %arg0, %c0_i32 : i32, i32
  }
}

</mosaic_0001>

<llo_original>
// kernel: predictor_forward.1
$region0: #{predictor_forward.1}
  #allocation0 [shape = 'u32[]', space=smem, size = 0x4, offset = 0x4, fixed_abs, tag = 'smem constant byte address 0x4 - core index']
  #allocation1 [shape = 'u32[144,128]{1,0:T(1,128)}', space=vmem, size = 0x12000, scoped, tag = 'internal scratch']
  #allocation2 [shape = 'f32[8,128]{1,0:T(8,128)}', space=vmem, size = 0x1000, scoped, tag = 'scratch operand']
  %s0 = inlined_call_operand.hbm [shape: f32[12,256], index: 0, kind: input, shape index: {}]
  %s1 = inlined_call_operand.hbm [shape: f32[256,128], index: 1, kind: input, shape index: {}]
  %s2 = inlined_call_operand.vmem [shape: f32[1,128], index: 2, kind: input, shape index: {}]
  %s3 = inlined_call_operand.hbm [shape: f32[12,128], index: 3, kind: output, shape index: {}]
  %s4 = sld [smem:[#allocation0]]
  $region61: #{predictor_forward.1} parent=0
    _
  %s6 = ssub.s32 1, %s4
  %s7 = scalar_select 0, %s6, %s4
  $region1: #{predictor_forward.1} parent=0
    #allocation3 [shape = 'u8[16384]{0}', space=vmem, size = 0x4000, scoped, tag = 'input window, operand 0']
    #allocation4 [shape = 's32[2]{0}', space=sflag, size = 0x8, scoped, tag = 'scoped memory for predictor_forward.1']
    #allocation5 [shape = 's32[2]{0}', space=sflag, size = 0x8, scoped, tag = 'scoped memory for predictor_forward.1']
    #allocation6 [shape = 'u8[131072]{0}', space=vmem, size = 0x20000, scoped, tag = 'input window, operand 1, single buffered']
    #allocation7 [shape = 's32[1]{0}', space=sflag, size = 0x4, scoped, tag = 'scoped memory for predictor_forward.1']
    #allocation8 [shape = 'u8[8192]{0}', space=vmem, size = 0x2000, scoped, tag = 'output window, operand 0']
    %8 = vsyncpa [#allocation4], 0
    %s9 = scalar_lea.sflag [#allocation4], 1
    %10 = vsyncpa %s9, 0
    %11 = vsyncpa [#allocation7], 0
    %12 = vsyncpa [#allocation5], 0
    %s13 = scalar_lea.sflag [#allocation5], 1
    %14 = vsyncpa %s13, 0
    loop: start=0, step=1, limit=4
    $region2: #{predictor_forward.1} parent=1 // loop_pre_header
      _
    $region3: #{predictor_forward.1} parent=1 // loop_header
      %s16 = sphi 0, %s20
      %p17 = scmp.ge.s32.totalorder %s16, 4
      %s23 = sphi 0, %s35
      %s24 = sphi 0, %s31
      %s25 = sphi 0, %s23
      %s26 = sphi 0, %s24
      %s27 = sphi 0, %s25
      %s28 = sphi 0, %s26
      %s40 = sphi 0, %s42
      %s43 = sphi 0, %s40
      %s44 = sphi 0, %s43
      %s60 = sphi 0, %s44
      %s66 = sphi 0, %s68
      %s69 = sphi 0, %s66
      %s70 = sphi 0, %s69
      %s86 = sphi 0, %s70
      %s90 = sphi 0, %s90
      %s92 = sphi 0, %s90
      %s93 = sphi 0, %s92
      %s107 = sphi 0, %s93
      %s113 = sphi 0, %s115
      %s116 = sphi 0, %s113
      %s117 = sphi 0, %s116
      %s133 = sphi 0, %s117
    $region4: #{predictor_forward.1} parent=1 // loop_header_branch
      %19 = sbr.rel (%p17) target = $region8
    $region5: #{predictor_forward.1} parent=1 // loop_body
      %s21 = ssub.s32 %s16, 1
      %s22 = ssub.s32 %s16, 2
      %s29 = sadd.s32 1, %s24
      %p30 = scmp.ge.s32.totalorder %s29, 1
      %s31 = scalar_select %p30, 0, %s29
      %s32 = sadd.s32 1, %s23
      %s33 = scalar_select %p30, %s32, %s23
      %p34 = scmp.ge.s32.totalorder %s33, 2
      %s35 = scalar_select %p34, 0, %s33
      %s36 = ssub.s32 %s23, %s35
      %s37 = ssub.s32 %s24, %s31
      %s38 = sor.u32 %s36, %s37
      %p39 = scmp.eq.s32.totalorder %s38, 0
      %s41 = sadd.s32 %s40, 1
      %s42 = scalar_select %p39, %s40, %s41
      %p45 = pneg %p39
      %p46 = scmp.eq.s32.totalorder %s16, 1
      %p47 = por %p45, %p46
      %p48 = scmp.ne.s32.totalorder %s40, %s43
      %p49 = scmp.eq.s32.totalorder %s16, 0
      %p50 = por %p48, %p49
      %p51 = scmp.ne.s32.totalorder %s40, %s43
      %p52 = scmp.eq.s32.totalorder %s21, 1
      %p53 = por %p51, %p52
      %p54 = scmp.ne.s32.totalorder %s43, %s44
      %p55 = scmp.eq.s32.totalorder %s21, 0
      %p56 = por %p54, %p55
      %p57 = scmp.ne.s32.totalorder %s43, %s44
      %p58 = scmp.eq.s32.totalorder %s22, 1
      %p59 = por %p57, %p58
      %p61 = scmp.ne.s32.totalorder %s44, %s60
      %p62 = scmp.eq.s32.totalorder %s22, 0
      %p63 = por %p61, %p62
      %s64 = ssub.s32 %s24, %s31
      %p65 = scmp.eq.s32.totalorder %s64, 0
      %s67 = sadd.s32 %s66, 1
      %s68 = scalar_select %p65, %s66, %s67
      %p71 = pneg %p65
      %p72 = scmp.eq.s32.totalorder %s16, 1
      %p73 = por %p71, %p72
      %p74 = scmp.ne.s32.totalorder %s66, %s69
      %p75 = scmp.eq.s32.totalorder %s16, 0
      %p76 = por %p74, %p75
      %p77 = scmp.ne.s32.totalorder %s66, %s69
      %p78 = scmp.eq.s32.totalorder %s21, 1
      %p79 = por %p77, %p78
      %p80 = scmp.ne.s32.totalorder %s69, %s70
      %p81 = scmp.eq.s32.totalorder %s21, 0
      %p82 = por %p80, %p81
      %p83 = scmp.ne.s32.totalorder %s69, %s70
      %p84 = scmp.eq.s32.totalorder %s22, 1
      %p85 = por %p83, %p84
      %p87 = scmp.ne.s32.totalorder %s70, %s86
      %p88 = scmp.eq.s32.totalorder %s22, 0
      %p89 = por %p87, %p88
      %s91 = sadd.s32 %s90, 1
      %p94 = scmp.eq.s32.totalorder %s16, 1
      %p95 = scmp.ne.s32.totalorder %s90, %s92
      %p96 = scmp.eq.s32.totalorder %s16, 0
      %p97 = por %p95, %p96
      %p98 = scmp.ne.s32.totalorder %s90, %s92
      %p99 = scmp.eq.s32.totalorder %s21, 1
      %p100 = por %p98, %p99
      %p101 = scmp.ne.s32.totalorder %s92, %s93
      %p102 = scmp.eq.s32.totalorder %s21, 0
      %p103 = por %p101, %p102
      %p104 = scmp.ne.s32.totalorder %s92, %s93
      %p105 = scmp.eq.s32.totalorder %s22, 1
      %p106 = por %p104, %p105
      %p108 = scmp.ne.s32.totalorder %s93, %s107
      %p109 = scmp.eq.s32.totalorder %s22, 0
      %p110 = por %p108, %p109
      %s111 = ssub.s32 %s23, %s35
      %p112 = scmp.eq.s32.totalorder %s111, 0
      %s114 = sadd.s32 %s113, 1
      %s115 = scalar_select %p112, %s113, %s114
      %p118 = pneg %p112
      %p119 = scmp.eq.s32.totalorder %s16, 1
      %p120 = por %p118, %p119
      %p121 = scmp.ne.s32.totalorder %s113, %s116
      %p122 = scmp.eq.s32.totalorder %s16, 0
      %p123 = por %p121, %p122
      %p124 = scmp.ne.s32.totalorder %s113, %s116
      %p125 = scmp.eq.s32.totalorder %s21, 1
      %p126 = por %p124, %p125
      %p127 = scmp.ne.s32.totalorder %s116, %s117
      %p128 = scmp.eq.s32.totalorder %s21, 0
      %p129 = por %p127, %p128
      %p130 = scmp.ne.s32.totalorder %s116, %s117
      %p131 = scmp.eq.s32.totalorder %s22, 1
      %p132 = por %p130, %p131
      %p134 = scmp.ne.s32.totalorder %s117, %s133
      %p135 = scmp.eq.s32.totalorder %s22, 0
      %p136 = por %p134, %p135
      %p137 = scmp.le.s32.totalorder 1, %s16
      %p138 = scmp.lt.s32.totalorder %s16, 3
      %p139 = pnand %p137, %p138
      %p140 = pneg %p139
      // Predicated region
      $region9: #{predictor_forward.1} parent=5 // pred_check
        _
      $region10: #{predictor_forward.1} parent=5 // pred_check_branch
        %142 = sbr.rel (%p139) target = $region12
      $region11: #{predictor_forward.1} parent=5 // pred_region
        %s143 = ssub.s32 %s16, 1
        // Predicated region
        $region13: #{predictor_forward.1} parent=11 // pred_check
          %p144 = pneg %p82
        $region14: #{predictor_forward.1} parent=11 // pred_check_branch
          %146 = sbr.rel (%p144) target = $region16
        $region15: #{predictor_forward.1} parent=11 // pred_region
          %s147 = smul.u32 32, %s26
          %s149 = ssub.s32 4096, 4096
          %150 = vsyncadd [#allocation7], %s149
          %s151 = smul.addr %s147, 128
          %s152 = scalar_lea.hbm %s1, %s151
          %s153 = sshll.u32 [#allocation6], 4
          %s154 = int_to_ptr.vmem [resolvable:$true] %s153
          %159 = dma.hbm_to_vmem [thread:$0]  %s152, 4096, %s154, [#allocation7], 128, 128, 8
        $region16: #{predictor_forward.1} parent=11 // pred_fallthru
          _
        // Predicated region
        $region17: #{predictor_forward.1} parent=11 // pred_check
          %p160 = pneg %p103
        $region18: #{predictor_forward.1} parent=11 // pred_check_branch
          %162 = sbr.rel (%p160) target = $region20
        $region19: #{predictor_forward.1} parent=11 // pred_region
          _
        $region20: #{predictor_forward.1} parent=11 // pred_fallthru
          _
      $region12: #{predictor_forward.1} parent=5 // pred_fallthru
        _
      %p163 = scmp.lt.s32.totalorder %s16, 2
      // Predicated region
      $region21: #{predictor_forward.1} parent=5 // pred_check
        %p164 = pneg %p163
      $region22: #{predictor_forward.1} parent=5 // pred_check_branch
        %166 = sbr.rel (%p164) target = $region24
      $region23: #{predictor_forward.1} parent=5 // pred_region
        // Predicated region
        $region25: #{predictor_forward.1} parent=23 // pred_check
          %p167 = pneg %p50
        $region26: #{predictor_forward.1} parent=23 // pred_check_branch
          %169 = sbr.rel (%p167) target = $region28
        $region27: #{predictor_forward.1} parent=23 // pred_region
          %s170 = sand.u32 %s40, 1
          %s171 = scalar_lea.sflag [#allocation4], %s170
          %s172 = sand.u32 %s40, 1
          %s173 = smul.addr %s172, 16
          %s174 = scalar_lea.vmem [#allocation3], %s173
          %s175 = smul.u32 2, %s24
          %s177 = ssub.s32 256, 256
          %178 = vsyncadd %s171, %s177
          %s179 = smul.addr %s23, 2
          %s180 = sadd.s32 %s175, %s179
          %s181 = smul.addr %s180, 128
          %s182 = scalar_lea.hbm %s0, %s181
          %s184 = sshll.u32 %s174, 4
          %s185 = int_to_ptr.vmem [resolvable:$true] %s184
          %187 = dma.hbm_to_vmem [thread:$0]  %s182, 256, %s185, %s171
        $region28: #{predictor_forward.1} parent=23 // pred_fallthru
          _
      $region24: #{predictor_forward.1} parent=5 // pred_fallthru
        _
      %p188 = scmp.le.s32.totalorder 1, %s16
      %p189 = scmp.lt.s32.totalorder %s16, 3
      %p190 = pnand %p188, %p189
      %p191 = pneg %p190
      // Predicated region
      $region29: #{predictor_forward.1} parent=5 // pred_check
        _
      $region30: #{predictor_forward.1} parent=5 // pred_check_branch
        %193 = sbr.rel (%p190) target = $region32
      $region31: #{predictor_forward.1} parent=5 // pred_region
        %s194 = ssub.s32 %s16, 1
        %s195 = sand.u32 %s43, 1
        %s196 = scalar_lea.sflag [#allocation4], %s195
        %s197 = sand.u32 %s43, 1
        %s198 = smul.addr %s197, 16
        %s199 = scalar_lea.vmem [#allocation3], %s198
        // Predicated region
        $region33: #{predictor_forward.1} parent=31 // pred_check
          %p200 = pneg %p56
        $region34: #{predictor_forward.1} parent=31 // pred_check_branch
          %202 = sbr.rel (%p200) target = $region36
        $region35: #{predictor_forward.1} parent=31 // pred_region
          %203 = dma.done %s196, 256
        $region36: #{predictor_forward.1} parent=31 // pred_fallthru
          _
        // Predicated region
        $region37: #{predictor_forward.1} parent=31 // pred_check
          %p204 = pneg %p82
        $region38: #{predictor_forward.1} parent=31 // pred_check_branch
          %206 = sbr.rel (%p204) target = $region40
        $region39: #{predictor_forward.1} parent=31 // pred_region
          %207 = dma.done [#allocation7], 4096
        $region40: #{predictor_forward.1} parent=31 // pred_fallthru
          _
        %s208 = sand.u32 %s43, 1
        %s209 = scalar_lea.sflag [#allocation4], %s208
        %s210 = sand.u32 %s43, 1
        %s211 = smul.addr %s210, 16
        %s212 = scalar_lea.vmem [#allocation3], %s211
        %p213 = pneg %p56
        %p214 = pneg %p53
        %p215 = pneg %p82
        %p216 = pneg %p79
        %p217 = pneg %p103
        %p218 = pneg %p100
        %p219 = pneg %p129
        %p220 = pneg %p126
        %s221 = sand.u32 %s116, 1
        %s222 = scalar_lea.sflag [#allocation5], %s221
        %s223 = sand.u32 %s116, 1
        %s224 = smul.addr %s223, 8
        %s225 = scalar_lea.vmem [#allocation8], %s224
        %s226 = smul.u32 2, %s26
        %s227 = smul.u32 32, %s26
        %p228 = scmp.eq.s32.totalorder %s26, 0
        // Predicated region
        $region41: #{predictor_forward.1} parent=31 // pred_check
          %p229 = pneg %p228
        $region42: #{predictor_forward.1} parent=31 // pred_check_branch
          %231 = sbr.rel (%p229) target = $region44
        $region43: #{predictor_forward.1} parent=31 // pred_region
          %232 = vst [vmem:[#allocation2] sm:$0xff] 0.0
        $region44: #{predictor_forward.1} parent=31 // pred_fallthru
          _
        %v233 = vld [vmem:[#allocation2] sm:$0xff]
        %v234 = vld [vmem:[%s199] sm:$0xff]
        %v235 = vld [vmem:[%s199 + $0x8] sm:$0xff]
        %v236 = vld [vmem:[#allocation6] sm:$0xff]
        %v237 = vld [vmem:[#allocation6 + $0x8] sm:$0xff]
        %v238 = vld [vmem:[#allocation6 + $0x10] sm:$0xff]
        %v239 = vld [vmem:[#allocation6 + $0x18] sm:$0xff]
        %v240 = vld [vmem:[#allocation6 + $0x20] sm:$0xff]
        %v241 = vld [vmem:[#allocation6 + $0x28] sm:$0xff]
        %v242 = vld [vmem:[#allocation6 + $0x30] sm:$0xff]
        %v243 = vld [vmem:[#allocation6 + $0x38] sm:$0xff]
        %v244 = vld [vmem:[#allocation6 + $0x40] sm:$0xff]
        %v245 = vld [vmem:[#allocation6 + $0x48] sm:$0xff]
        %v246 = vld [vmem:[#allocation6 + $0x50] sm:$0xff]
        %v247 = vld [vmem:[#allocation6 + $0x58] sm:$0xff]
        %v248 = vld [vmem:[#allocation6 + $0x60] sm:$0xff]
        %v249 = vld [vmem:[#allocation6 + $0x68] sm:$0xff]
        %v250 = vld [vmem:[#allocation6 + $0x70] sm:$0xff]
        %v251 = vld [vmem:[#allocation6 + $0x78] sm:$0xff]
        %v252 = vld [vmem:[#allocation6 + $0x80] sm:$0xff]
        %v253 = vld [vmem:[#allocation6 + $0x88] sm:$0xff]
        %v254 = vld [vmem:[#allocation6 + $0x90] sm:$0xff]
        %v255 = vld [vmem:[#allocation6 + $0x98] sm:$0xff]
        %v256 = vld [vmem:[#allocation6 + $0xa0] sm:$0xff]
        %v257 = vld [vmem:[#allocation6 + $0xa8] sm:$0xff]
        %v258 = vld [vmem:[#allocation6 + $0xb0] sm:$0xff]
        %v259 = vld [vmem:[#allocation6 + $0xb8] sm:$0xff]
        %v260 = vld [vmem:[#allocation6 + $0xc0] sm:$0xff]
        %v261 = vld [vmem:[#allocation6 + $0xc8] sm:$0xff]
        %v262 = vld [vmem:[#allocation6 + $0xd0] sm:$0xff]
        %v263 = vld [vmem:[#allocation6 + $0xd8] sm:$0xff]
        %v264 = vld [vmem:[#allocation6 + $0xe0] sm:$0xff]
        %v265 = vld [vmem:[#allocation6 + $0xe8] sm:$0xff]
        %v266 = vld [vmem:[#allocation6 + $0xf0] sm:$0xff]
        %v267 = vld [vmem:[#allocation6 + $0xf8] sm:$0xff]
        %268 = vmatprep.subr.mxu0 0.0
        %269 = vmatpush1.msra.mxu0 %v251
        %270 = vmatprep.subr.mxu0 0.0
        %271 = vmatpush1.msra.mxu0 %v250
        %272 = vmatprep.subr.mxu0 0.0
        %273 = vmatpush1.msra.mxu0 %v249
        %274 = vmatprep.subr.mxu0 0.0
        %275 = vmatpush1.msra.mxu0 %v248
        %276 = vmatprep.subr.mxu0 0.0
        %277 = vmatpush1.msra.mxu0 %v247
        %278 = vmatprep.subr.mxu0 0.0
        %279 = vmatpush1.msra.mxu0 %v246
        %280 = vmatprep.subr.mxu0 0.0
        %281 = vmatpush1.msra.mxu0 %v245
        %282 = vmatprep.subr.mxu0 0.0
        %283 = vmatpush1.msra.mxu0 %v244
        %284 = vmatprep.subr.mxu0 0.0
        %285 = vmatpush1.msra.mxu0 %v243
        %286 = vmatprep.subr.mxu0 0.0
        %287 = vmatpush1.msra.mxu0 %v242
        %288 = vmatprep.subr.mxu0 0.0
        %289 = vmatpush1.msra.mxu0 %v241
        %290 = vmatprep.subr.mxu0 0.0
        %291 = vmatpush1.msra.mxu0 %v240
        %292 = vmatprep.subr.mxu0 0.0
        %293 = vmatpush1.msra.mxu0 %v239
        %294 = vmatprep.subr.mxu0 0.0
        %295 = vmatpush1.msra.mxu0 %v238
        %296 = vmatprep.subr.mxu0 0.0
        %297 = vmatpush1.msra.mxu0 %v237
        %298 = vmatprep.subr.mxu0 0.0
        %299 = vmatpush1.msra.mxu0 %v236
        %300 = vmatprep.subr.mxu0 0.0
        %301 = vmatpush2.msra.mxu0 %v267
        %302 = vmatprep.subr.mxu0 0.0
        %303 = vmatpush2.msra.mxu0 %v266
        %304 = vmatprep.subr.mxu0 0.0
        %305 = vmatpush2.msra.mxu0 %v265
        %306 = vmatprep.subr.mxu0 0.0
        %307 = vmatpush2.msra.mxu0 %v264
        %308 = vmatprep.subr.mxu0 0.0
        %309 = vmatpush2.msra.mxu0 %v263
        %310 = vmatprep.subr.mxu0 0.0
        %311 = vmatpush2.msra.mxu0 %v262
        %312 = vmatprep.subr.mxu0 0.0
        %313 = vmatpush2.msra.mxu0 %v261
        %314 = vmatprep.subr.mxu0 0.0
        %315 = vmatpush2.msra.mxu0 %v260
        %316 = vmatprep.subr.mxu0 0.0
        %317 = vmatpush2.msra.mxu0 %v259
        %318 = vmatprep.subr.mxu0 0.0
        %319 = vmatpush2.msra.mxu0 %v258
        %320 = vmatprep.subr.mxu0 0.0
        %321 = vmatpush2.msra.mxu0 %v257
        %322 = vmatprep.subr.mxu0 0.0
        %323 = vmatpush2.msra.mxu0 %v256
        %324 = vmatprep.subr.mxu0 0.0
        %325 = vmatpush2.msra.mxu0 %v255
        %326 = vmatprep.subr.mxu0 0.0
        %327 = vmatpush2.msra.mxu0 %v254
        %328 = vmatprep.subr.mxu0 0.0
        %329 = vmatpush2.msra.mxu0 %v253
        %330 = vmatprep.subr.mxu0 0.0
        %331 = vmatpush2.msra.mxu0 %v252
        %332 = vmatprep.mubr.f32.mxu0 %v235
        %333 = vmatmul.mubr.f32.gmra.mxu0 %v234
        %v334 = vpop.f32.mrf.mxu0
        %v335 = vadd.f32 0.0, %v334
        %v336 = vpop.f32.mrf.mxu0
        %337 = vdwg.mxu0
        %v338 = vadd.f32 %v233, %v335
        %339 = vst [vmem:[#allocation2] sm:$0xff] %v338
        // Predicated region
        $region45: #{predictor_forward.1} parent=31 // pred_check
          %p340 = pneg %p228
        $region46: #{predictor_forward.1} parent=31 // pred_check_branch
          %342 = sbr.rel (%p340) target = $region48
        $region47: #{predictor_forward.1} parent=31 // pred_region
          %v343 = vld [vmem:[#allocation2] sm:$0xff]
          %v344 = vld [vmem:[%s2] sm:$0x1]
          %v346 = vlaneseq
          %v347 = vshrl.u32 %v346, 7
          %v348 = vsub.s32 0, %v347
          %v349 = vrot.slane %v344, %v348
          %v351 = vadd.f32 %v343, %v349
          %352 = vst [vmem:[%s225] sm:$0xff] %v351
        $region48: #{predictor_forward.1} parent=31 // pred_fallthru
          _
        %s353 = sand.u32 %s116, 1
        %s354 = scalar_lea.sflag [#allocation5], %s353
        %s355 = sand.u32 %s116, 1
        %s356 = smul.addr %s355, 8
        %s357 = scalar_lea.vmem [#allocation8], %s356
        // Predicated region
        $region49: #{predictor_forward.1} parent=31 // pred_check
          %p358 = pneg %p126
        $region50: #{predictor_forward.1} parent=31 // pred_check_branch
          %360 = sbr.rel (%p358) target = $region52
        $region51: #{predictor_forward.1} parent=31 // pred_region
          %s362 = ssub.s32 128, 128
          %363 = vsyncadd %s354, %s362
          %s364 = smul.addr %s25, 128
          %s365 = scalar_lea.hbm %s3, %s364
          %s367 = sshll.u32 %s357, 4
          %s368 = int_to_ptr.vmem [resolvable:$true] %s367
          %370 = dma.vmem_to_hbm [thread:$0]  %s368, 128, %s365, %s354
        $region52: #{predictor_forward.1} parent=31 // pred_fallthru
          _
      $region32: #{predictor_forward.1} parent=5 // pred_fallthru
        _
      %p371 = scmp.le.s32.totalorder 2, %s16
      // Predicated region
      $region53: #{predictor_forward.1} parent=5 // pred_check
        %p372 = pneg %p371
      $region54: #{predictor_forward.1} parent=5 // pred_check_branch
        %374 = sbr.rel (%p372) target = $region56
      $region55: #{predictor_forward.1} parent=5 // pred_region
        %s375 = ssub.s32 %s16, 2
        // Predicated region
        $region57: #{predictor_forward.1} parent=55 // pred_check
          %p376 = pneg %p132
        $region58: #{predictor_forward.1} parent=55 // pred_check_branch
          %378 = sbr.rel (%p376) target = $region60
        $region59: #{predictor_forward.1} parent=55 // pred_region
          %s379 = sand.u32 %s117, 1
          %s380 = scalar_lea.sflag [#allocation5], %s379
          %s381 = sand.u32 %s117, 1
          %s382 = smul.addr %s381, 8
          %s383 = scalar_lea.vmem [#allocation8], %s382
          %384 = dma.done %s380, 128
        $region60: #{predictor_forward.1} parent=55 // pred_fallthru
          _
      $region56: #{predictor_forward.1} parent=5 // pred_fallthru
        _
    $region6: #{predictor_forward.1} parent=1 // loop_footer
      %s20 = sadd.s32 1, %s16
    $region7: #{predictor_forward.1} parent=1 // loop_footer_branch
      %15 = sbr.rel target = $region3
    $region8: #{predictor_forward.1} parent=1 // loop_exit
      _
    %385 = vsyncpa [#allocation4], 1
    %s386 = scalar_lea.sflag [#allocation4], 1
    %387 = vsyncpa %s386, 1
    %388 = vsyncpa [#allocation7], 1
    %389 = vsyncpa [#allocation5], 1
    %s390 = scalar_lea.sflag [#allocation5], 1
    %391 = vsyncpa %s390, 1

</llo_original>
